<compile_context>
chip_gen: v5e
topology: v5e:2x2
jax: 0.10.0
libtpu: 0.0.40
codegen_flags: <defaults>
</compile_context>

<pallas_src>
import jax
import jax.numpy as jnp
from jax.experimental import pallas as pl
from jax.experimental.pallas import tpu as pltpu


C_PAD = 128                              # lane-dense classifier width
_TARGET_TILE_BYTES = 4 * 1024 * 1024     # ~4 MiB of bf16 hidden state per step


def _round_up(x, m):
    return (x + m - 1) // m * m


def _vmem_limit_bytes():
    """Per-generation VMEM limit: leave headroom on v7x (64 MiB physical VMEM),
    exploit the larger 128 MiB VMEM on v5e/v6e."""
    try:
        cap = int(pltpu.get_tpu_info().vmem_capacity_bytes)
    except Exception:
        return 64 * 1024 * 1024
    return int(min(cap - 16 * 1024 * 1024, 100 * 1024 * 1024))


def _choose_tiles(B, S, H, tb, ts):
    """(8,128)-aligned tiles targeting ~4 MiB of hidden state per grid step."""
    if tb is None:
        tb = min(_round_up(B, 8), 64)
        # Shrink tb if even the minimum S tile would blow the per-step budget.
        while tb > 8 and tb * 128 * H * 2 > _TARGET_TILE_BYTES:
            tb = max(8, (tb // 2) // 8 * 8)
        # Keep >= 2 steps on the parallel batch axis so v7x's two TensorCores
        # both get work (harmless on v5e/v6e with a single TC).
        if B >= 16 and _round_up(B, tb) // tb < 2:
            tb = max(8, (tb // 2) // 8 * 8)
    else:
        tb = _round_up(min(tb, B), 8)
    if ts is None:
        ts_budget = _TARGET_TILE_BYTES // (tb * H * 2)
        ts = max(128, min(_round_up(S, 128), (ts_budget // 128) * 128))
    else:
        ts = _round_up(min(ts, S), 128)
    return tb, ts


def _classifier_head_kernel(hid_ref, mask_ref, scale_ref, w_ref, b_ref,
                            out_ref, acc_ref):
    """One (B-tile, S-tile) grid step: masked mean pooling + linear classifier.

    hid_ref  : [tb, ts, H]  bf16  hidden-state tile
    mask_ref : [tb, 1, ts]  bf16  attention-mask tile (0/1)
    scale_ref: [tb, 1]      f32   1 / clamp(sum(mask), 1e-9) per row
    w_ref    : [H, C_PAD]   f32   fc weight, transposed + zero-padded
    b_ref    : [1, C_PAD]   f32   fc bias, zero-padded
    out_ref  : [tb, C_PAD]  f32   logits tile (resident across the S axis)
    acc_ref  : [tb, 1, H]   f32   running masked embedding sum
    """
    s_idx = pl.program_id(1)

    @pl.when(s_idx == 0)
    def _():
        acc_ref[...] = jnp.zeros_like(acc_ref)

    # Masked sequence-sum on the (otherwise idle) MXU: bf16 in, f32 accumulate.
    #   [tb, 1, ts] @ [tb, ts, H] -> [tb, 1, H]
    # Avoids the bf16->f32 convert + elementwise mul + cross-lane sum on the
    # VPU/XLU (the binding slots at v7x bandwidth; v5e's VPU lacks bf16).
    acc_ref[...] += jax.lax.dot_general(
        mask_ref[...], hid_ref[...],
        dimension_numbers=(((2,), (1,)), ((0,), (0,))),
        preferred_element_type=jnp.float32)

    @pl.when(s_idx == pl.num_programs(1) - 1)
    def _():
        # MeanPooling finalize: multiply by the precomputed per-row reciprocal
        # of clamp(sum_mask, 1e-9) (done once, after the full S reduction, so
        # padded positions/rows stay correct).
        mean = acc_ref[...][:, 0, :] * scale_ref[...]          # [tb, H] f32
        # MultiSampleDropout in eval mode reduces to a single fc application.
        out_ref[...] = (jnp.dot(mean, w_ref[...],
                                preferred_element_type=jnp.float32)
                        + b_ref[...])


def classifier_head(last_hidden_state, attention_mask, fc_weight_t_pad,
                    fc_bias_pad, *, tb=None, ts=None):
    """Masked mean pooling + fc head, tiled over (batch, sequence)."""
    B, S, H = last_hidden_state.shape
    C_pad = fc_weight_t_pad.shape[1]
    tb, ts = _choose_tiles(B, S, H, tb, ts)
    B_pad, S_pad = _round_up(B, tb), _round_up(S, ts)

    hid = last_hidden_state
    if hid.dtype != jnp.bfloat16:
        # NOTE: extra full HBM pass; prefer producing bf16 hidden states
        # upstream (classifier_forward does exactly that).
        hid = hid.astype(jnp.bfloat16)
    mask = attention_mask.astype(jnp.bfloat16)            # tiny [B, S]

    if (B_pad, S_pad) != (B, S):
        # Fallback only: classifier_forward pads the cheap integer inputs
        # upstream so this full pass over [B,S,H] is normally never taken.
        hid = jnp.pad(hid, ((0, B_pad - B), (0, S_pad - S), (0, 0)))
        mask = jnp.pad(mask, ((0, B_pad - B), (0, S_pad - S)))

    # Per-row mean scale (tiny [B_pad] reduce) folded in after the S reduction.
    msum = jnp.sum(mask.astype(jnp.float32), axis=1)
    scale = (1.0 / jnp.maximum(msum, 1e-9)).reshape(B_pad, 1)
    mask3 = mask.reshape(B_pad, 1, S_pad)

    grid = (B_pad // tb, S_pad // ts)

    cost = pl.CostEstimate(
        flops=2 * B_pad * S_pad * H + 2 * B_pad * H * C_pad,
        transcendentals=0,
        bytes_accessed=(hid.size * 2 + mask3.size * 2 + scale.size * 4
                        + fc_weight_t_pad.size * 4 + fc_bias_pad.size * 4
                        + B_pad * C_pad * 4),
    )

    out = pl.pallas_call(
        _classifier_head_kernel,
        out_shape=jax.ShapeDtypeStruct((B_pad, C_pad), jnp.float32),
        grid_spec=pltpu.PrefetchScalarGridSpec(
            num_scalar_prefetch=0,
            grid=grid,
            in_specs=[
                pl.BlockSpec((tb, ts, H), lambda i, j: (i, j, 0)),   # hidden
                pl.BlockSpec((tb, 1, ts), lambda i, j: (i, 0, j)),   # mask
                pl.BlockSpec((tb, 1), lambda i, j: (i, 0)),          # 1/sum_mask
                pl.BlockSpec((H, C_pad), lambda i, j: (0, 0)),       # fc W^T
                pl.BlockSpec((1, C_pad), lambda i, j: (0, 0)),       # fc bias
            ],
            out_specs=pl.BlockSpec((tb, C_pad), lambda i, j: (i, 0)),
            scratch_shapes=[
                pltpu.VMEM((tb, 1, H), jnp.float32),   # masked embedding sum
            ],
        ),
        compiler_params=pltpu.CompilerParams(
            dimension_semantics=("parallel", "arbitrary"),
            vmem_limit_bytes=_vmem_limit_bytes(),
        ),
        cost_estimate=cost,
    )(hid, mask3, scale, fc_weight_t_pad, fc_bias_pad)

    return out[:B]


def classifier_forward(input_ids, attention_masks, params, num_classes=2,
                       *, tb=None, ts=None):
    """Full Classifier.forward (backbone replaced by an embedding lookup)."""
    B, S = input_ids.shape
    H = params["embedding"].shape[1]
    tb_, ts_ = _choose_tiles(B, S, H, tb, ts)
    B_pad, S_pad = _round_up(B, tb_), _round_up(S, ts_)

    # Pad only the cheap integer inputs so the big [B,S,H] hidden state is
    # born at padded shape and bf16 — no extra full-HBM passes in the wrapper.
    if (B_pad, S_pad) != (B, S):
        input_ids = jnp.pad(input_ids, ((0, B_pad - B), (0, S_pad - S)))
        attention_masks = jnp.pad(attention_masks,
                                  ((0, B_pad - B), (0, S_pad - S)))

    # TODO(synk): the HuggingFace AutoModel backbone ("snunlp/KR-SBERT-...")
    # has no clean Pallas equivalent; a deterministic bf16 embedding lookup
    # stands in for last_hidden_state here.
    last_hidden_state = params["embedding"][input_ids]    # [B_pad, S_pad, H] bf16

    logits_pad = classifier_head(
        last_hidden_state, attention_masks,
        params["fc_weight_t_pad"], params["fc_bias_pad"], tb=tb_, ts=ts_)
    return logits_pad[:B, :num_classes]


def init_params(key, vocab_size=512, hidden_size=128, num_classes=2,
                initializer_range=0.02):
    k_emb, k_fc = jax.random.split(key)
    # Stand-in hidden states are O(1) like real encoder outputs; stored bf16 so
    # the lookup produces the kernel's streaming dtype directly.
    embedding = jax.random.normal(k_emb, (vocab_size, hidden_size),
                                  dtype=jnp.float32).astype(jnp.bfloat16)
    # nn.Linear weight is [C, H] with N(0, initializer_range), bias zero;
    # store transposed and zero-padded to 128 lanes for the kernel matmul.
    fc_weight = jax.random.normal(k_fc, (num_classes, hidden_size),
                                  dtype=jnp.float32) * initializer_range
    c_pad = max(C_PAD, _round_up(num_classes, 128))
    fc_weight_t_pad = jnp.zeros((hidden_size, c_pad), jnp.float32)
    fc_weight_t_pad = fc_weight_t_pad.at[:, :num_classes].set(fc_weight.T)
    fc_bias_pad = jnp.zeros((1, c_pad), jnp.float32)
    return {
        "embedding": embedding,
        "fc_weight_t_pad": fc_weight_t_pad,
        "fc_bias_pad": fc_bias_pad,
    }


if __name__ == "__main__":
    B, S, H, C, V = 8, 256, 128, 2, 512

    key = jax.random.PRNGKey(0)
    k_ids, k_params = jax.random.split(key)

    input_ids = jax.random.randint(k_ids, (B, S), 0, V, dtype=jnp.int32)
    # deterministic attention masks: row b attends to the first S - 16*b tokens
    lens = jnp.maximum(S - 16 * jnp.arange(B), 1)
    attention_masks = (jnp.arange(S)[None, :] < lens[:, None]).astype(jnp.int32)

    params = init_params(k_params, vocab_size=V, hidden_size=H, num_classes=C)

    def reference(ids, am):
        hid = params["embedding"][ids].astype(jnp.float32)
        m = am.astype(jnp.float32)[:, :, None]
        mean = (hid * m).sum(1) / jnp.maximum(m.sum(1), 1e-9)
        ref = jnp.dot(mean, params["fc_weight_t_pad"][:, :C],
                      precision=jax.lax.Precision.HIGHEST)
        return ref + params["fc_bias_pad"][:, :C]

    # 1) small explicit tiles -> exercises the S-tiled accumulator path.
    logits = classifier_forward(input_ids, attention_masks, params,
                                num_classes=C, tb=8, ts=128)
    logits = jax.block_until_ready(logits)
    ref = reference(input_ids, attention_masks)
    assert logits.shape == (B, C)
    assert jnp.allclose(logits, ref, rtol=1e-2, atol=2e-4), \
        "mismatch vs JAX reference (tiled path)"

    # 2) auto tiles + non-multiple-of-128 sequence -> exercises the cheap
    #    wrapper-side padding (only int ids / mask padded, mask-0 tail).
    S2 = 200
    ids2, am2 = input_ids[:, :S2], attention_masks[:, :S2]
    logits2 = classifier_forward(ids2, am2, params, num_classes=C)
    logits2 = jax.block_until_ready(logits2)
    ref2 = reference(ids2, am2)
    assert logits2.shape == (B, C)
    assert jnp.allclose(logits2, ref2, rtol=1e-2, atol=2e-4), \
        "mismatch vs JAX reference (auto-tile path)"

    print("KERNEL_OK")
</pallas_src>

<mosaic_0001>
module attributes {stable_mosaic.version = 11 : i64} {
  func.func @_classifier_head_kernel(%arg0: i32, %arg1: i32, %arg2: memref<8x128x128xbf16, #tpu.memory_space<vmem>>, %arg3: memref<8x1x128xbf16, #tpu.memory_space<vmem>>, %arg4: memref<8x1xf32, #tpu.memory_space<vmem>>, %arg5: memref<128x128xf32, #tpu.memory_space<vmem>>, %arg6: memref<1x128xf32, #tpu.memory_space<vmem>>, %arg7: memref<8x128xf32, #tpu.memory_space<vmem>>, %arg8: memref<8x1x128xf32, #tpu.memory_space<vmem>>) attributes {dimension_semantics = [#tpu.dimension_semantics<parallel>, #tpu.dimension_semantics<arbitrary>], iteration_bounds = array<i64: 1, 2>, scalar_prefetch = 0 : i64, scratch_operands = 1 : i64, tpu.core_type = #tpu.core_type<tc>, window_params = [{transform_indices = @transform_0, window_bounds = array<i64: 8, 128, 128>}, {transform_indices = @transform_1, window_bounds = array<i64: 8, 1, 128>}, {transform_indices = @transform_2, window_bounds = array<i64: 8, 1>}, {pipeline_mode = #tpu.pipeline_mode<synchronous>, transform_indices = @transform_3, window_bounds = array<i64: 128, 128>}, {pipeline_mode = #tpu.pipeline_mode<synchronous>, transform_indices = @transform_4, window_bounds = array<i64: 1, 128>}, {transform_indices = @transform_5, window_bounds = array<i64: 8, 128>}]} {
    %c0_i32 = arith.constant 0 : i32
    %0 = arith.cmpi eq, %arg1, %c0_i32 : i32
    %1 = arith.extui %0 : i1 to i32
    %c0_i32_0 = arith.constant 0 : i32
    %2 = arith.cmpi ne, %1, %c0_i32_0 : i32
    scf.if %2 {
      %cst_13 = arith.constant 0.000000e+00 : f32
      %12 = vector.broadcast %cst_13 : f32 to vector<8x1x128xf32>
      %c0_14 = arith.constant 0 : index
      %c0_15 = arith.constant 0 : index
      %c0_16 = arith.constant 0 : index
      %13 = vector.load %arg8[%c0_14, %c0_15, %c0_16] : memref<8x1x128xf32, #tpu.memory_space<vmem>>, vector<8x1x128xf32>
      tpu.vector_store %arg8[%c0_14, %c0_15, %c0_16], %12 {strides = array<i32>} : memref<8x1x128xf32, #tpu.memory_space<vmem>>, vector<8x1x128xf32>,
    } else {
    }
    %c0 = arith.constant 0 : index
    %c0_1 = arith.constant 0 : index
    %c0_2 = arith.constant 0 : index
    %3 = vector.load %arg8[%c0, %c0_1, %c0_2] : memref<8x1x128xf32, #tpu.memory_space<vmem>>, vector<8x1x128xf32>
    %c0_3 = arith.constant 0 : index
    %c0_4 = arith.constant 0 : index
    %c0_5 = arith.constant 0 : index
    %4 = vector.load %arg3[%c0_3, %c0_4, %c0_5] : memref<8x1x128xbf16, #tpu.memory_space<vmem>>, vector<8x1x128xbf16>
    %c0_6 = arith.constant 0 : index
    %c0_7 = arith.constant 0 : index
    %c0_8 = arith.constant 0 : index
    %5 = vector.load %arg2[%c0_6, %c0_7, %c0_8] : memref<8x128x128xbf16, #tpu.memory_space<vmem>>, vector<8x128x128xbf16>
    %cst = arith.constant dense<0.000000e+00> : vector<8x1x128xf32>
    %6 = tpu.matmul %4, %5, %cst {dimension_numbers = #tpu.dot_dimension_numbers<[2], [1], [1], [2], [0, 0, 0, 1, 1, 2], [0], [0]>} : vector<8x1x128xbf16>, vector<8x128x128xbf16>, vector<8x1x128xf32> -> vector<8x1x128xf32>
    %7 = arith.addf %3, %6 : vector<8x1x128xf32>
    %c0_9 = arith.constant 0 : index
    %c0_10 = arith.constant 0 : index
    %c0_11 = arith.constant 0 : index
    %8 = vector.load %arg8[%c0_9, %c0_10, %c0_11] : memref<8x1x128xf32, #tpu.memory_space<vmem>>, vector<8x1x128xf32>
    tpu.vector_store %arg8[%c0_9, %c0_10, %c0_11], %7 {strides = array<i32>} : memref<8x1x128xf32, #tpu.memory_space<vmem>>, vector<8x1x128xf32>,
    %c1_i32 = arith.constant 1 : i32
    %9 = arith.cmpi eq, %arg1, %c1_i32 : i32
    %10 = arith.extui %9 : i1 to i32
    %c0_i32_12 = arith.constant 0 : i32
    %11 = arith.cmpi ne, %10, %c0_i32_12 : i32
    scf.if %11 {
      %c0_13 = arith.constant 0 : index
      %c0_14 = arith.constant 0 : index
      %c0_15 = arith.constant 0 : index
      %12 = vector.load %arg8[%c0_13, %c0_14, %c0_15] : memref<8x1x128xf32, #tpu.memory_space<vmem>>, vector<8x1x128xf32>
      %13 = vector.shape_cast %12 : vector<8x1x128xf32> to vector<8x128xf32>
      %c0_16 = arith.constant 0 : index
      %c0_17 = arith.constant 0 : index
      %14 = vector.load %arg4[%c0_16, %c0_17] : memref<8x1xf32, #tpu.memory_space<vmem>>, vector<8x1xf32>
      %15 = vector.broadcast %14 : vector<8x1xf32> to vector<8x128xf32>
      %16 = arith.mulf %13, %15 : vector<8x128xf32>
      %c0_18 = arith.constant 0 : index
      %c0_19 = arith.constant 0 : index
      %17 = vector.load %arg5[%c0_18, %c0_19] : memref<128x128xf32, #tpu.memory_space<vmem>>, vector<128x128xf32>
      %cst_20 = arith.constant dense<0.000000e+00> : vector<8x128xf32>
      %18 = tpu.matmul %16, %17, %cst_20 {dimension_numbers = #tpu.dot_dimension_numbers<[1], [0], [0], [1], [0, 0, 1, 1], [], []>} : vector<8x128xf32>, vector<128x128xf32>, vector<8x128xf32> -> vector<8x128xf32>
      %c0_21 = arith.constant 0 : index
      %c0_22 = arith.constant 0 : index
      %19 = vector.load %arg6[%c0_21, %c0_22] : memref<1x128xf32, #tpu.memory_space<vmem>>, vector<1x128xf32>
      %20 = vector.broadcast %19 : vector<1x128xf32> to vector<8x128xf32>
      %21 = arith.addf %18, %20 : vector<8x128xf32>
      %c0_23 = arith.constant 0 : index
      %c0_24 = arith.constant 0 : index
      %22 = vector.load %arg7[%c0_23, %c0_24] : memref<8x128xf32, #tpu.memory_space<vmem>>, vector<8x128xf32>
      tpu.vector_store %arg7[%c0_23, %c0_24], %21 {strides = array<i32>} : memref<8x128xf32, #tpu.memory_space<vmem>>, vector<8x128xf32>,
    } else {
    }
    return
  }
  func.func @transform_0(%arg0: i32, %arg1: i32) -> (i32, i32, i32) {
    %c0_i32 = arith.constant 0 : i32
    %c0_i32_0 = arith.constant 0 : i32
    return %arg0, %arg1, %c0_i32 : i32, i32, i32
  }
  func.func @transform_1(%arg0: i32, %arg1: i32) -> (i32, i32, i32) {
    %c0_i32 = arith.constant 0 : i32
    %c0_i32_0 = arith.constant 0 : i32
    return %arg0, %c0_i32, %arg1 : i32, i32, i32
  }
  func.func @transform_2(%arg0: i32, %arg1: i32) -> (i32, i32) {
    %c0_i32 = arith.constant 0 : i32
    %c0_i32_0 = arith.constant 0 : i32
    return %arg0, %c0_i32 : i32, i32
  }
  func.func @transform_3(%arg0: i32, %arg1: i32) -> (i32, i32) {
    %c0_i32 = arith.constant 0 : i32
    %c0_i32_0 = arith.constant 0 : i32
    %c0_i32_1 = arith.constant 0 : i32
    return %c0_i32, %c0_i32_0 : i32, i32
  }
  func.func @transform_4(%arg0: i32, %arg1: i32) -> (i32, i32) {
    %c0_i32 = arith.constant 0 : i32
    %c0_i32_0 = arith.constant 0 : i32
    %c0_i32_1 = arith.constant 0 : i32
    return %c0_i32, %c0_i32_0 : i32, i32
  }
  func.func @transform_5(%arg0: i32, %arg1: i32) -> (i32, i32) {
    %c0_i32 = arith.constant 0 : i32
    %c0_i32_0 = arith.constant 0 : i32
    return %arg0, %c0_i32 : i32, i32
  }
}

</mosaic_0001>

<llo_original>
// kernel: tpu_custom_call.1
$region0: #{tpu_custom_call.1}
  #allocation0 [shape = 'u32[]', space=smem, size = 0x4, offset = 0x4, fixed_abs, tag = 'smem constant byte address 0x4 - core index']
  #allocation1 [shape = 'u32[72,128]{1,0:T(1,128)}', space=vmem, size = 0x9000, scoped, tag = 'internal scratch']
  #allocation2 [shape = 'f32[8,1,128]{2,1,0:T(1,128)}', space=vmem, size = 0x1000, scoped, tag = 'scratch operand']
  #allocation10 [shape = 's32[]', space=sflag, size = 0x4, offset = 0, fixed_abs, tag = 'sflag constant byte address 0x0 - dummy sync flag']
  %s0 = inlined_call_operand.hbm [shape: bf16[8,256,128], index: 0, kind: input, shape index: {}]
  %s1 = inlined_call_operand.vmem [shape: bf16[8,1,256], index: 1, kind: input, shape index: {}]
  %s2 = inlined_call_operand.vmem [shape: f32[8,1], index: 2, kind: input, shape index: {}]
  %s3 = inlined_call_operand.hbm [shape: f32[128,128], index: 3, kind: input, shape index: {}]
  %s4 = inlined_call_operand.vmem [shape: f32[1,128], index: 4, kind: input, shape index: {}]
  %s5 = inlined_call_operand.hbm [shape: f32[8,128], index: 5, kind: output, shape index: {}]
  %s6 = sld [smem:[#allocation0]]
  $region110: #{tpu_custom_call.1} parent=0
    _
  %s8 = ssub.s32 1, %s6
  %s9 = scalar_select 0, %s8, %s6
  $region1: #{tpu_custom_call.1} parent=0
    #allocation3 [shape = 'u8[524288]{0}', space=vmem, size = 0x80000, scoped, tag = 'input window, operand 0']
    #allocation4 [shape = 's32[2]{0}', space=sflag, size = 0x8, scoped, tag = 'scoped memory for tpu_custom_call.1']
    #allocation5 [shape = 's32[2]{0}', space=sflag, size = 0x8, scoped, tag = 'scoped memory for tpu_custom_call.1']
    #allocation6 [shape = 'u8[8192]{0}', space=vmem, size = 0x2000, scoped, tag = 'input window, operand 1']
    #allocation7 [shape = 'u8[65536]{0}', space=vmem, size = 0x10000, scoped, tag = 'input window, operand 3, single buffered']
    #allocation8 [shape = 's32[1]{0}', space=sflag, size = 0x4, scoped, tag = 'scoped memory for tpu_custom_call.1']
    #allocation9 [shape = 'u8[4096]{0}', space=vmem, size = 0x1000, scoped, tag = 'output window, operand 0, single buffered']
    %10 = vsyncpa [#allocation4], 0
    %s11 = scalar_lea.sflag [#allocation4], 1
    %12 = vsyncpa %s11, 0
    %13 = vsyncpa [#allocation8], 0
    %14 = vsyncpa [#allocation5], 0
    loop: start=0, step=1, limit=4
    $region2: #{tpu_custom_call.1} parent=1 // loop_pre_header
      _
    $region3: #{tpu_custom_call.1} parent=1 // loop_header
      %s16 = sphi 0, %s20
      %p17 = scmp.ge.s32.totalorder %s16, 4
      %s23 = sphi 0, %s35
      %s24 = sphi 0, %s31
      %s25 = sphi 0, %s23
      %s26 = sphi 0, %s24
      %s27 = sphi 0, %s25
      %s28 = sphi 0, %s26
      %s40 = sphi 0, %s42
      %s43 = sphi 0, %s40
      %s44 = sphi 0, %s43
      %s60 = sphi 0, %s44
      %s68 = sphi 0, %s70
      %s71 = sphi 0, %s68
      %s72 = sphi 0, %s71
      %s88 = sphi 0, %s72
      %s94 = sphi 0, %s96
      %s97 = sphi 0, %s94
      %s98 = sphi 0, %s97
      %s114 = sphi 0, %s98
      %s118 = sphi 0, %s118
      %s120 = sphi 0, %s118
      %s121 = sphi 0, %s120
      %s135 = sphi 0, %s121
      %s139 = sphi 0, %s139
      %s141 = sphi 0, %s139
      %s142 = sphi 0, %s141
      %s156 = sphi 0, %s142
      %s162 = sphi 0, %s164
      %s165 = sphi 0, %s162
      %s166 = sphi 0, %s165
      %s182 = sphi 0, %s166
    $region4: #{tpu_custom_call.1} parent=1 // loop_header_branch
      %19 = sbr.rel (%p17) target = $region8
    $region5: #{tpu_custom_call.1} parent=1 // loop_body
      %s21 = ssub.s32 %s16, 1
      %s22 = ssub.s32 %s16, 2
      %s29 = sadd.s32 1, %s24
      %p30 = scmp.ge.s32.totalorder %s29, 2
      %s31 = scalar_select %p30, 0, %s29
      %s32 = sadd.s32 1, %s23
      %s33 = scalar_select %p30, %s32, %s23
      %p34 = scmp.ge.s32.totalorder %s33, 1
      %s35 = scalar_select %p34, 0, %s33
      %s36 = ssub.s32 %s23, %s35
      %s37 = ssub.s32 %s24, %s31
      %s38 = sor.u32 %s36, %s37
      %p39 = scmp.eq.s32.totalorder %s38, 0
      %s41 = sadd.s32 %s40, 1
      %s42 = scalar_select %p39, %s40, %s41
      %p45 = pneg %p39
      %p46 = scmp.eq.s32.totalorder %s16, 1
      %p47 = por %p45, %p46
      %p48 = scmp.ne.s32.totalorder %s40, %s43
      %p49 = scmp.eq.s32.totalorder %s16, 0
      %p50 = por %p48, %p49
      %p51 = scmp.ne.s32.totalorder %s40, %s43
      %p52 = scmp.eq.s32.totalorder %s21, 1
      %p53 = por %p51, %p52
      %p54 = scmp.ne.s32.totalorder %s43, %s44
      %p55 = scmp.eq.s32.totalorder %s21, 0
      %p56 = por %p54, %p55
      %p57 = scmp.ne.s32.totalorder %s43, %s44
      %p58 = scmp.eq.s32.totalorder %s22, 1
      %p59 = por %p57, %p58
      %p61 = scmp.ne.s32.totalorder %s44, %s60
      %p62 = scmp.eq.s32.totalorder %s22, 0
      %p63 = por %p61, %p62
      %s64 = ssub.s32 %s23, %s35
      %s65 = ssub.s32 %s24, %s31
      %s66 = sor.u32 %s64, %s65
      %p67 = scmp.eq.s32.totalorder %s66, 0
      %s69 = sadd.s32 %s68, 1
      %s70 = scalar_select %p67, %s68, %s69
      %p73 = pneg %p67
      %p74 = scmp.eq.s32.totalorder %s16, 1
      %p75 = por %p73, %p74
      %p76 = scmp.ne.s32.totalorder %s68, %s71
      %p77 = scmp.eq.s32.totalorder %s16, 0
      %p78 = por %p76, %p77
      %p79 = scmp.ne.s32.totalorder %s68, %s71
      %p80 = scmp.eq.s32.totalorder %s21, 1
      %p81 = por %p79, %p80
      %p82 = scmp.ne.s32.totalorder %s71, %s72
      %p83 = scmp.eq.s32.totalorder %s21, 0
      %p84 = por %p82, %p83
      %p85 = scmp.ne.s32.totalorder %s71, %s72
      %p86 = scmp.eq.s32.totalorder %s22, 1
      %p87 = por %p85, %p86
      %p89 = scmp.ne.s32.totalorder %s72, %s88
      %p90 = scmp.eq.s32.totalorder %s22, 0
      %p91 = por %p89, %p90
      %s92 = ssub.s32 %s23, %s35
      %p93 = scmp.eq.s32.totalorder %s92, 0
      %s95 = sadd.s32 %s94, 1
      %s96 = scalar_select %p93, %s94, %s95
      %p99 = pneg %p93
      %p100 = scmp.eq.s32.totalorder %s16, 1
      %p101 = por %p99, %p100
      %p102 = scmp.ne.s32.totalorder %s94, %s97
      %p103 = scmp.eq.s32.totalorder %s16, 0
      %p104 = por %p102, %p103
      %p105 = scmp.ne.s32.totalorder %s94, %s97
      %p106 = scmp.eq.s32.totalorder %s21, 1
      %p107 = por %p105, %p106
      %p108 = scmp.ne.s32.totalorder %s97, %s98
      %p109 = scmp.eq.s32.totalorder %s21, 0
      %p110 = por %p108, %p109
      %p111 = scmp.ne.s32.totalorder %s97, %s98
      %p112 = scmp.eq.s32.totalorder %s22, 1
      %p113 = por %p111, %p112
      %p115 = scmp.ne.s32.totalorder %s98, %s114
      %p116 = scmp.eq.s32.totalorder %s22, 0
      %p117 = por %p115, %p116
      %s119 = sadd.s32 %s118, 1
      %p122 = scmp.eq.s32.totalorder %s16, 1
      %p123 = scmp.ne.s32.totalorder %s118, %s120
      %p124 = scmp.eq.s32.totalorder %s16, 0
      %p125 = por %p123, %p124
      %p126 = scmp.ne.s32.totalorder %s118, %s120
      %p127 = scmp.eq.s32.totalorder %s21, 1
      %p128 = por %p126, %p127
      %p129 = scmp.ne.s32.totalorder %s120, %s121
      %p130 = scmp.eq.s32.totalorder %s21, 0
      %p131 = por %p129, %p130
      %p132 = scmp.ne.s32.totalorder %s120, %s121
      %p133 = scmp.eq.s32.totalorder %s22, 1
      %p134 = por %p132, %p133
      %p136 = scmp.ne.s32.totalorder %s121, %s135
      %p137 = scmp.eq.s32.totalorder %s22, 0
      %p138 = por %p136, %p137
      %s140 = sadd.s32 %s139, 1
      %p143 = scmp.eq.s32.totalorder %s16, 1
      %p144 = scmp.ne.s32.totalorder %s139, %s141
      %p145 = scmp.eq.s32.totalorder %s16, 0
      %p146 = por %p144, %p145
      %p147 = scmp.ne.s32.totalorder %s139, %s141
      %p148 = scmp.eq.s32.totalorder %s21, 1
      %p149 = por %p147, %p148
      %p150 = scmp.ne.s32.totalorder %s141, %s142
      %p151 = scmp.eq.s32.totalorder %s21, 0
      %p152 = por %p150, %p151
      %p153 = scmp.ne.s32.totalorder %s141, %s142
      %p154 = scmp.eq.s32.totalorder %s22, 1
      %p155 = por %p153, %p154
      %p157 = scmp.ne.s32.totalorder %s142, %s156
      %p158 = scmp.eq.s32.totalorder %s22, 0
      %p159 = por %p157, %p158
      %s160 = ssub.s32 %s23, %s35
      %p161 = scmp.eq.s32.totalorder %s160, 0
      %s163 = sadd.s32 %s162, 1
      %s164 = scalar_select %p161, %s162, %s163
      %p167 = pneg %p161
      %p168 = scmp.eq.s32.totalorder %s16, 1
      %p169 = por %p167, %p168
      %p170 = scmp.ne.s32.totalorder %s162, %s165
      %p171 = scmp.eq.s32.totalorder %s16, 0
      %p172 = por %p170, %p171
      %p173 = scmp.ne.s32.totalorder %s162, %s165
      %p174 = scmp.eq.s32.totalorder %s21, 1
      %p175 = por %p173, %p174
      %p176 = scmp.ne.s32.totalorder %s165, %s166
      %p177 = scmp.eq.s32.totalorder %s21, 0
      %p178 = por %p176, %p177
      %p179 = scmp.ne.s32.totalorder %s165, %s166
      %p180 = scmp.eq.s32.totalorder %s22, 1
      %p181 = por %p179, %p180
      %p183 = scmp.ne.s32.totalorder %s166, %s182
      %p184 = scmp.eq.s32.totalorder %s22, 0
      %p185 = por %p183, %p184
      %p186 = scmp.le.s32.totalorder 1, %s16
      %p187 = scmp.lt.s32.totalorder %s16, 3
      %p188 = pnand %p186, %p187
      %p189 = pneg %p188
      // Predicated region
      $region9: #{tpu_custom_call.1} parent=5 // pred_check
        _
      $region10: #{tpu_custom_call.1} parent=5 // pred_check_branch
        %191 = sbr.rel (%p188) target = $region12
      $region11: #{tpu_custom_call.1} parent=5 // pred_region
        %s192 = ssub.s32 %s16, 1
        // Predicated region
        $region13: #{tpu_custom_call.1} parent=11 // pred_check
          %p193 = pneg %p110
        $region14: #{tpu_custom_call.1} parent=11 // pred_check_branch
          %195 = sbr.rel (%p193) target = $region16
        $region15: #{tpu_custom_call.1} parent=11 // pred_region
          %p196 = scmp.lt.s32.totalorder %s25, 0
          %s197 = scalar_select %p196, %s25, 0
          %s198 = smul.addr %s197, 8
          %s199 = scalar_lea.vmem %s2, %s198
        $region16: #{tpu_custom_call.1} parent=11 // pred_fallthru
          _
        // Predicated region
        $region17: #{tpu_custom_call.1} parent=11 // pred_check
          %p200 = pneg %p131
        $region18: #{tpu_custom_call.1} parent=11 // pred_check_branch
          %202 = sbr.rel (%p200) target = $region20
        $region19: #{tpu_custom_call.1} parent=11 // pred_region
          %204 = vsyncadd [#allocation8], 0
          %s205 = sshll.u32 %s3, 4
          %s206 = int_to_ptr.hbm [resolvable:$true] %s205
          %s207 = sshll.u32 [#allocation7], 4
          %s208 = int_to_ptr.vmem [resolvable:$true] %s207
          %213 = dma.hbm_to_vmem [thread:$0]  %s206, 2048, %s208, [#allocation8], 128, 128, 8
        $region20: #{tpu_custom_call.1} parent=11 // pred_fallthru
          _
        // Predicated region
        $region21: #{tpu_custom_call.1} parent=11 // pred_check
          %p214 = pneg %p152
        $region22: #{tpu_custom_call.1} parent=11 // pred_check_branch
          %216 = sbr.rel (%p214) target = $region24
        $region23: #{tpu_custom_call.1} parent=11 // pred_region
          _
        $region24: #{tpu_custom_call.1} parent=11 // pred_fallthru
          _
      $region12: #{tpu_custom_call.1} parent=5 // pred_fallthru
        _
      %p217 = scmp.lt.s32.totalorder %s16, 2
      // Predicated region
      $region25: #{tpu_custom_call.1} parent=5 // pred_check
        %p218 = pneg %p217
      $region26: #{tpu_custom_call.1} parent=5 // pred_check_branch
        %220 = sbr.rel (%p218) target = $region28
      $region27: #{tpu_custom_call.1} parent=5 // pred_region
        // Predicated region
        $region29: #{tpu_custom_call.1} parent=27 // pred_check
          %p221 = pneg %p50
        $region30: #{tpu_custom_call.1} parent=27 // pred_check_branch
          %223 = sbr.rel (%p221) target = $region32
        $region31: #{tpu_custom_call.1} parent=27 // pred_region
          #allocation11 [shape = 'u32[6]{0}', space=smem, size = 0x18, scoped, tag = 'DMA stride descriptor']
          %s224 = sand.u32 %s40, 1
          %s225 = scalar_lea.sflag [#allocation4], %s224
          %s226 = sand.u32 %s40, 1
          %s227 = smul.addr %s226, 512
          %s228 = scalar_lea.vmem [#allocation3], %s227
          %s229 = smul.u32 8, %s23
          %s230 = smul.u32 16, %s24
          %232 = vsyncadd %s225, 0
          %s233 = smul.addr %s229, 32
          %s234 = sadd.s32 %s230, %s233
          %s235 = smul.addr %s234, 4
          %s236 = scalar_lea.hbm %s0, %s235
          %s238 = sshll.u32 1, 14
          %s239 = sxor.u32 4294967295, %s238
          %s241 = sld [smem:[#allocation0]]
          %s242 = sadd.s32 2, %s241
          %s244 = sshll.u32 7, 26
          %s245 = sxor.u32 4294967295, %s244
          %s246 = sand.u32 0, %s245
          %s247 = sshll.u32 %s242, 26
          %s248 = sor.u32 %s246, %s247
          %s249 = sshll.u32 %s236, 4
          %s250 = int_to_ptr.hbm [resolvable:$true] %s249
          %s251 = sshll.u32 %s228, 4
          %s252 = int_to_ptr.vmem [resolvable:$true] %s251
          %258 = sst [smem:[#allocation11]] 2048
          %s259 = scalar_lea.smem [#allocation11], 1
          %260 = sst [smem:[%s259]] 1024
          %s261 = scalar_lea.smem [#allocation11], 2
          %262 = sst [smem:[%s261]] 16
          %s263 = scalar_lea.smem [#allocation11], 3
          %264 = sst [smem:[%s263]] 64
          %s265 = scalar_lea.smem [#allocation11], 4
          %266 = sst [smem:[%s265]] 64
          %s267 = scalar_lea.smem [#allocation11], 5
          %268 = sst [smem:[%s267]] 4
          %270 = dma.general %s250, 8192, %s252, %s225, [#allocation10], [#allocation11], %s248, 0
        $region32: #{tpu_custom_call.1} parent=27 // pred_fallthru
          _
        // Predicated region
        $region33: #{tpu_custom_call.1} parent=27 // pred_check
          %p271 = pneg %p78
        $region34: #{tpu_custom_call.1} parent=27 // pred_check_branch
          %273 = sbr.rel (%p271) target = $region36
        $region35: #{tpu_custom_call.1} parent=27 // pred_region
          %s274 = sand.u32 %s68, 1
          %s275 = sand.u32 %s68, 1
          %s276 = smul.addr %s275, 8
          %s277 = scalar_lea.vmem [#allocation6], %s276
          %s278 = smul.u32 8, %s23
          %s279 = smul.addr %s278, 2
          %s280 = sadd.s32 %s24, %s279
          %s281 = scalar_lea.vmem %s1, %s280
          // Predicated region
          $region37: #{tpu_custom_call.1} parent=35 // pred_check
            _
          $region38: #{tpu_custom_call.1} parent=35 // pred_check_branch
            %283 = sbr.rel (0) target = $region40
          $region39: #{tpu_custom_call.1} parent=35 // pred_region
            // Predicated region
            $region41: #{tpu_custom_call.1} parent=39 // pred_check
              _
            $region42: #{tpu_custom_call.1} parent=39 // pred_check_branch
              %285 = sbr.rel target = $region44
            $region43: #{tpu_custom_call.1} parent=39 // pred_region
              // Predicated region
              $region56: #{tpu_custom_call.1} parent=43 // pred_check
                _
              $region57: #{tpu_custom_call.1} parent=43 // pred_check_branch
                %315 = sbr.rel (0) target = $region59
              $region58: #{tpu_custom_call.1} parent=43 // pred_region
                loop: start=0, step=1, limit=1
                $region60: #{tpu_custom_call.1} parent=58 // loop_pre_header
                  _
                $region61: #{tpu_custom_call.1} parent=58 // loop_header
                  %s317 = sphi 0, %s321
                  %p318 = scmp.ge.s32.totalorder %s317, 1
                  %s322 = sphi %s281, %s281
                  %s323 = sphi %s277, %s277
                $region62: #{tpu_custom_call.1} parent=58 // loop_header_branch
                  %320 = sbr.rel (%p318) target = $region66
                $region63: #{tpu_custom_call.1} parent=58 // loop_body
                  _
                $region64: #{tpu_custom_call.1} parent=58 // loop_footer
                  %s321 = sadd.s32 1, %s317
                $region65: #{tpu_custom_call.1} parent=58 // loop_footer_branch
                  %316 = sbr.rel target = $region61
                $region66: #{tpu_custom_call.1} parent=58 // loop_exit
                  _
                %s325 = ssub.s32 2, 1
                loop: start=0, step=1, limit=1
                $region67: #{tpu_custom_call.1} parent=58 // loop_pre_header
                  _
                $region68: #{tpu_custom_call.1} parent=58 // loop_header
                  %s327 = sphi 0, %s331
                  %p328 = scmp.ge.s32.totalorder %s327, 1
                  %s332 = sphi %s281, %s281
                  %s333 = sphi %s277, %s277
                $region69: #{tpu_custom_call.1} parent=58 // loop_header_branch
                  %330 = sbr.rel (%p328) target = $region73
                $region70: #{tpu_custom_call.1} parent=58 // loop_body
                  %v334 = vld [vmem:[%s332] sm:%s325]
                  %335 = vst [vmem:[%s333] sm:%s325] %v334
                  %v336 = vld [vmem:[%s332 + $0x2] sm:%s325]
                  %337 = vst [vmem:[%s333 + $0x1] sm:%s325] %v336
                  %v338 = vld [vmem:[%s332 + $0x4] sm:%s325]
                  %339 = vst [vmem:[%s333 + $0x2] sm:%s325] %v338
                  %v340 = vld [vmem:[%s332 + $0x6] sm:%s325]
                  %341 = vst [vmem:[%s333 + $0x3] sm:%s325] %v340
                  %v342 = vld [vmem:[%s332 + $0x8] sm:%s325]
                  %343 = vst [vmem:[%s333 + $0x4] sm:%s325] %v342
                  %v344 = vld [vmem:[%s332 + $0xa] sm:%s325]
                  %345 = vst [vmem:[%s333 + $0x5] sm:%s325] %v344
                  %v346 = vld [vmem:[%s332 + $0xc] sm:%s325]
                  %347 = vst [vmem:[%s333 + $0x6] sm:%s325] %v346
                  %v348 = vld [vmem:[%s332 + $0xe] sm:%s325]
                  %349 = vst [vmem:[%s333 + $0x7] sm:%s325] %v348
                $region71: #{tpu_custom_call.1} parent=58 // loop_footer
                  %s331 = sadd.s32 1, %s327
                $region72: #{tpu_custom_call.1} parent=58 // loop_footer_branch
                  %326 = sbr.rel target = $region68
                $region73: #{tpu_custom_call.1} parent=58 // loop_exit
                  _
              $region59: #{tpu_custom_call.1} parent=43 // pred_fallthru
                _
            $region44: #{tpu_custom_call.1} parent=39 // pred_fallthru
              _
            // Predicated region
            $region45: #{tpu_custom_call.1} parent=39 // pred_check
              _
            $region46: #{tpu_custom_call.1} parent=39 // pred_check_branch
              %287 = sbr.rel (0) target = $region48
            $region47: #{tpu_custom_call.1} parent=39 // pred_region
              %s289 = ssub.s32 2, 1
              loop: start=0, step=1, limit=1
              $region49: #{tpu_custom_call.1} parent=47 // loop_pre_header
                _
              $region50: #{tpu_custom_call.1} parent=47 // loop_header
                %s291 = sphi 0, %s295
                %p292 = scmp.ge.s32.totalorder %s291, 1
                %s296 = sphi %s281, %s281
                %s297 = sphi %s277, %s277
              $region51: #{tpu_custom_call.1} parent=47 // loop_header_branch
                %294 = sbr.rel (%p292) target = $region55
              $region52: #{tpu_custom_call.1} parent=47 // loop_body
                %v298 = vld [vmem:[%s296] sm:%s289]
                %299 = vst [vmem:[%s297] sm:%s289] %v298
                %v300 = vld [vmem:[%s296 + $0x2] sm:%s289]
                %301 = vst [vmem:[%s297 + $0x1] sm:%s289] %v300
                %v302 = vld [vmem:[%s296 + $0x4] sm:%s289]
                %303 = vst [vmem:[%s297 + $0x2] sm:%s289] %v302
                %v304 = vld [vmem:[%s296 + $0x6] sm:%s289]
                %305 = vst [vmem:[%s297 + $0x3] sm:%s289] %v304
                %v306 = vld [vmem:[%s296 + $0x8] sm:%s289]
                %307 = vst [vmem:[%s297 + $0x4] sm:%s289] %v306
                %v308 = vld [vmem:[%s296 + $0xa] sm:%s289]
                %309 = vst [vmem:[%s297 + $0x5] sm:%s289] %v308
                %v310 = vld [vmem:[%s296 + $0xc] sm:%s289]
                %311 = vst [vmem:[%s297 + $0x6] sm:%s289] %v310
                %v312 = vld [vmem:[%s296 + $0xe] sm:%s289]
                %313 = vst [vmem:[%s297 + $0x7] sm:%s289] %v312
              $region53: #{tpu_custom_call.1} parent=47 // loop_footer
                %s295 = sadd.s32 1, %s291
              $region54: #{tpu_custom_call.1} parent=47 // loop_footer_branch
                %290 = sbr.rel target = $region50
              $region55: #{tpu_custom_call.1} parent=47 // loop_exit
                _
            $region48: #{tpu_custom_call.1} parent=39 // pred_fallthru
              _
          $region40: #{tpu_custom_call.1} parent=35 // pred_fallthru
            _
          %350 = vnop
        $region36: #{tpu_custom_call.1} parent=27 // pred_fallthru
          _
      $region28: #{tpu_custom_call.1} parent=5 // pred_fallthru
        _
      %p351 = scmp.le.s32.totalorder 1, %s16
      %p352 = scmp.lt.s32.totalorder %s16, 3
      %p353 = pnand %p351, %p352
      %p354 = pneg %p353
      // Predicated region
      $region74: #{tpu_custom_call.1} parent=5 // pred_check
        _
      $region75: #{tpu_custom_call.1} parent=5 // pred_check_branch
        %356 = sbr.rel (%p353) target = $region77
      $region76: #{tpu_custom_call.1} parent=5 // pred_region
        %s357 = ssub.s32 %s16, 1
        %s358 = sand.u32 %s43, 1
        %s359 = scalar_lea.sflag [#allocation4], %s358
        %s360 = sand.u32 %s43, 1
        %s361 = smul.addr %s360, 512
        %s362 = scalar_lea.vmem [#allocation3], %s361
        // Predicated region
        $region78: #{tpu_custom_call.1} parent=76 // pred_check
          %p363 = pneg %p56
        $region79: #{tpu_custom_call.1} parent=76 // pred_check_branch
          %365 = sbr.rel (%p363) target = $region81
        $region80: #{tpu_custom_call.1} parent=76 // pred_region
          %367 = dma.done %s359, 8192
        $region81: #{tpu_custom_call.1} parent=76 // pred_fallthru
          _
        %s368 = sand.u32 %s71, 1
        %s369 = sand.u32 %s71, 1
        %s370 = smul.addr %s369, 8
        %s371 = scalar_lea.vmem [#allocation6], %s370
        // Predicated region
        $region82: #{tpu_custom_call.1} parent=76 // pred_check
          %p372 = pneg %p84
        $region83: #{tpu_custom_call.1} parent=76 // pred_check_branch
          %374 = sbr.rel (%p372) target = $region85
        $region84: #{tpu_custom_call.1} parent=76 // pred_region
          _
        $region85: #{tpu_custom_call.1} parent=76 // pred_fallthru
          _
        // Predicated region
        $region86: #{tpu_custom_call.1} parent=76 // pred_check
          %p375 = pneg %p131
        $region87: #{tpu_custom_call.1} parent=76 // pred_check_branch
          %377 = sbr.rel (%p375) target = $region89
        $region88: #{tpu_custom_call.1} parent=76 // pred_region
          %379 = dma.done [#allocation8], 2048
        $region89: #{tpu_custom_call.1} parent=76 // pred_fallthru
          _
        %s380 = sand.u32 %s43, 1
        %s381 = scalar_lea.sflag [#allocation4], %s380
        %s382 = sand.u32 %s43, 1
        %s383 = smul.addr %s382, 512
        %s384 = scalar_lea.vmem [#allocation3], %s383
        %p385 = pneg %p56
        %p386 = pneg %p53
        %s387 = sand.u32 %s71, 1
        %s388 = sand.u32 %s71, 1
        %s389 = smul.addr %s388, 8
        %s390 = scalar_lea.vmem [#allocation6], %s389
        %p391 = pneg %p84
        %p392 = pneg %p81
        %p393 = scmp.lt.s32.totalorder %s25, 0
        %s394 = scalar_select %p393, %s25, 0
        %s395 = smul.addr %s394, 8
        %s396 = scalar_lea.vmem %s2, %s395
        %p397 = pneg %p110
        %p398 = pneg %p107
        %p399 = pneg %p131
        %p400 = pneg %p128
        %p401 = pneg %p152
        %p402 = pneg %p149
        %p403 = pneg %p178
        %p404 = pneg %p175
        %s405 = smul.u32 8, %s25
        %s406 = smul.u32 16, %s26
        %s407 = smul.u32 8, %s25
        %p408 = scmp.lt.s32.totalorder %s25, 0
        %s409 = scalar_select %p408, %s25, 0
        %s410 = smul.addr %s409, 8
        %s411 = scalar_lea.vmem %s2, %s410
        %p412 = scmp.eq.s32.totalorder %s26, 0
        // Predicated region
        $region90: #{tpu_custom_call.1} parent=76 // pred_check
          %p413 = pneg %p412
        $region91: #{tpu_custom_call.1} parent=76 // pred_check_branch
          %415 = sbr.rel (%p413) target = $region93
        $region92: #{tpu_custom_call.1} parent=76 // pred_region
          %416 = vst [vmem:[#allocation2] sm:$0x1] 0.0
          %417 = vst [vmem:[#allocation2 + $0x1] sm:$0x1] 0.0
          %418 = vst [vmem:[#allocation2 + $0x2] sm:$0x1] 0.0
          %419 = vst [vmem:[#allocation2 + $0x3] sm:$0x1] 0.0
          %420 = vst [vmem:[#allocation2 + $0x4] sm:$0x1] 0.0
          %421 = vst [vmem:[#allocation2 + $0x5] sm:$0x1] 0.0
          %422 = vst [vmem:[#allocation2 + $0x6] sm:$0x1] 0.0
          %423 = vst [vmem:[#allocation2 + $0x7] sm:$0x1] 0.0
        $region93: #{tpu_custom_call.1} parent=76 // pred_fallthru
          _
        %v424 = vld [vmem:[#allocation2] sm:$0x1]
        %v425 = vld [vmem:[#allocation2 + $0x1] sm:$0x1]
        %v426 = vld [vmem:[#allocation2 + $0x2] sm:$0x1]
        %v427 = vld [vmem:[#allocation2 + $0x3] sm:$0x1]
        %v428 = vld [vmem:[#allocation2 + $0x4] sm:$0x1]
        %v429 = vld [vmem:[#allocation2 + $0x5] sm:$0x1]
        %v430 = vld [vmem:[#allocation2 + $0x6] sm:$0x1]
        %v431 = vld [vmem:[#allocation2 + $0x7] sm:$0x1]
        %v432 = vld [vmem:[%s371] sm:$0x1]
        %v433 = vld [vmem:[%s371 + $0x1] sm:$0x1]
        %v434 = vld [vmem:[%s371 + $0x2] sm:$0x1]
        %v435 = vld [vmem:[%s371 + $0x3] sm:$0x1]
        %v436 = vld [vmem:[%s371 + $0x4] sm:$0x1]
        %v437 = vld [vmem:[%s371 + $0x5] sm:$0x1]
        %v438 = vld [vmem:[%s371 + $0x6] sm:$0x1]
        %v439 = vld [vmem:[%s371 + $0x7] sm:$0x1]
        %v440 = vld [vmem:[%s362] sm:$0xf]
        %v441 = vld [vmem:[%s362 + $0x4] sm:$0xf]
        %v442 = vld [vmem:[%s362 + $0x8] sm:$0xf]
        %v443 = vld [vmem:[%s362 + $0xc] sm:$0xf]
        %v444 = vld [vmem:[%s362 + $0x10] sm:$0xf]
        %v445 = vld [vmem:[%s362 + $0x14] sm:$0xf]
        %v446 = vld [vmem:[%s362 + $0x18] sm:$0xf]
        %v447 = vld [vmem:[%s362 + $0x1c] sm:$0xf]
        %v448 = vld [vmem:[%s362 + $0x20] sm:$0xf]
        %v449 = vld [vmem:[%s362 + $0x24] sm:$0xf]
        %v450 = vld [vmem:[%s362 + $0x28] sm:$0xf]
        %v451 = vld [vmem:[%s362 + $0x2c] sm:$0xf]
        %v452 = vld [vmem:[%s362 + $0x30] sm:$0xf]
        %v453 = vld [vmem:[%s362 + $0x34] sm:$0xf]
        %v454 = vld [vmem:[%s362 + $0x38] sm:$0xf]
        %v455 = vld [vmem:[%s362 + $0x3c] sm:$0xf]
        %v456 = vld [vmem:[%s362 + $0x40] sm:$0xf]
        %v457 = vld [vmem:[%s362 + $0x44] sm:$0xf]
        %v458 = vld [vmem:[%s362 + $0x48] sm:$0xf]
        %v459 = vld [vmem:[%s362 + $0x4c] sm:$0xf]
        %v460 = vld [vmem:[%s362 + $0x50] sm:$0xf]
        %v461 = vld [vmem:[%s362 + $0x54] sm:$0xf]
        %v462 = vld [vmem:[%s362 + $0x58] sm:$0xf]
        %v463 = vld [vmem:[%s362 + $0x5c] sm:$0xf]
        %v464 = vld [vmem:[%s362 + $0x60] sm:$0xf]
        %v465 = vld [vmem:[%s362 + $0x64] sm:$0xf]
        %v466 = vld [vmem:[%s362 + $0x68] sm:$0xf]
        %v467 = vld [vmem:[%s362 + $0x6c] sm:$0xf]
        %v468 = vld [vmem:[%s362 + $0x70] sm:$0xf]
        %v469 = vld [vmem:[%s362 + $0x74] sm:$0xf]
        %v470 = vld [vmem:[%s362 + $0x78] sm:$0xf]
        %v471 = vld [vmem:[%s362 + $0x7c] sm:$0xf]
        %v472 = vld [vmem:[%s362 + $0x80] sm:$0xf]
        %v473 = vld [vmem:[%s362 + $0x84] sm:$0xf]
        %v474 = vld [vmem:[%s362 + $0x88] sm:$0xf]
        %v475 = vld [vmem:[%s362 + $0x8c] sm:$0xf]
        %v476 = vld [vmem:[%s362 + $0x90] sm:$0xf]
        %v477 = vld [vmem:[%s362 + $0x94] sm:$0xf]
        %v478 = vld [vmem:[%s362 + $0x98] sm:$0xf]
        %v479 = vld [vmem:[%s362 + $0x9c] sm:$0xf]
        %v480 = vld [vmem:[%s362 + $0xa0] sm:$0xf]
        %v481 = vld [vmem:[%s362 + $0xa4] sm:$0xf]
        %v482 = vld [vmem:[%s362 + $0xa8] sm:$0xf]
        %v483 = vld [vmem:[%s362 + $0xac] sm:$0xf]
        %v484 = vld [vmem:[%s362 + $0xb0] sm:$0xf]
        %v485 = vld [vmem:[%s362 + $0xb4] sm:$0xf]
        %v486 = vld [vmem:[%s362 + $0xb8] sm:$0xf]
        %v487 = vld [vmem:[%s362 + $0xbc] sm:$0xf]
        %v488 = vld [vmem:[%s362 + $0xc0] sm:$0xf]
        %v489 = vld [vmem:[%s362 + $0xc4] sm:$0xf]
        %v490 = vld [vmem:[%s362 + $0xc8] sm:$0xf]
        %v491 = vld [vmem:[%s362 + $0xcc] sm:$0xf]
        %v492 = vld [vmem:[%s362 + $0xd0] sm:$0xf]
        %v493 = vld [vmem:[%s362 + $0xd4] sm:$0xf]
        %v494 = vld [vmem:[%s362 + $0xd8] sm:$0xf]
        %v495 = vld [vmem:[%s362 + $0xdc] sm:$0xf]
        %v496 = vld [vmem:[%s362 + $0xe0] sm:$0xf]
        %v497 = vld [vmem:[%s362 + $0xe4] sm:$0xf]
        %v498 = vld [vmem:[%s362 + $0xe8] sm:$0xf]
        %v499 = vld [vmem:[%s362 + $0xec] sm:$0xf]
        %v500 = vld [vmem:[%s362 + $0xf0] sm:$0xf]
        %v501 = vld [vmem:[%s362 + $0xf4] sm:$0xf]
        %v502 = vld [vmem:[%s362 + $0xf8] sm:$0xf]
        %v503 = vld [vmem:[%s362 + $0xfc] sm:$0xf]
        %v504 = vld [vmem:[%s362 + $0x100] sm:$0xf]
        %v505 = vld [vmem:[%s362 + $0x104] sm:$0xf]
        %v506 = vld [vmem:[%s362 + $0x108] sm:$0xf]
        %v507 = vld [vmem:[%s362 + $0x10c] sm:$0xf]
        %v508 = vld [vmem:[%s362 + $0x110] sm:$0xf]
        %v509 = vld [vmem:[%s362 + $0x114] sm:$0xf]
        %v510 = vld [vmem:[%s362 + $0x118] sm:$0xf]
        %v511 = vld [vmem:[%s362 + $0x11c] sm:$0xf]
        %v512 = vld [vmem:[%s362 + $0x120] sm:$0xf]
        %v513 = vld [vmem:[%s362 + $0x124] sm:$0xf]
        %v514 = vld [vmem:[%s362 + $0x128] sm:$0xf]
        %v515 = vld [vmem:[%s362 + $0x12c] sm:$0xf]
        %v516 = vld [vmem:[%s362 + $0x130] sm:$0xf]
        %v517 = vld [vmem:[%s362 + $0x134] sm:$0xf]
        %v518 = vld [vmem:[%s362 + $0x138] sm:$0xf]
        %v519 = vld [vmem:[%s362 + $0x13c] sm:$0xf]
        %v520 = vld [vmem:[%s362 + $0x140] sm:$0xf]
        %v521 = vld [vmem:[%s362 + $0x144] sm:$0xf]
        %v522 = vld [vmem:[%s362 + $0x148] sm:$0xf]
        %v523 = vld [vmem:[%s362 + $0x14c] sm:$0xf]
        %v524 = vld [vmem:[%s362 + $0x150] sm:$0xf]
        %v525 = vld [vmem:[%s362 + $0x154] sm:$0xf]
        %v526 = vld [vmem:[%s362 + $0x158] sm:$0xf]
        %v527 = vld [vmem:[%s362 + $0x15c] sm:$0xf]
        %v528 = vld [vmem:[%s362 + $0x160] sm:$0xf]
        %v529 = vld [vmem:[%s362 + $0x164] sm:$0xf]
        %v530 = vld [vmem:[%s362 + $0x168] sm:$0xf]
        %v531 = vld [vmem:[%s362 + $0x16c] sm:$0xf]
        %v532 = vld [vmem:[%s362 + $0x170] sm:$0xf]
        %v533 = vld [vmem:[%s362 + $0x174] sm:$0xf]
        %v534 = vld [vmem:[%s362 + $0x178] sm:$0xf]
        %v535 = vld [vmem:[%s362 + $0x17c] sm:$0xf]
        %v536 = vld [vmem:[%s362 + $0x180] sm:$0xf]
        %v537 = vld [vmem:[%s362 + $0x184] sm:$0xf]
        %v538 = vld [vmem:[%s362 + $0x188] sm:$0xf]
        %v539 = vld [vmem:[%s362 + $0x18c] sm:$0xf]
        %v540 = vld [vmem:[%s362 + $0x190] sm:$0xf]
        %v541 = vld [vmem:[%s362 + $0x194] sm:$0xf]
        %v542 = vld [vmem:[%s362 + $0x198] sm:$0xf]
        %v543 = vld [vmem:[%s362 + $0x19c] sm:$0xf]
        %v544 = vld [vmem:[%s362 + $0x1a0] sm:$0xf]
        %v545 = vld [vmem:[%s362 + $0x1a4] sm:$0xf]
        %v546 = vld [vmem:[%s362 + $0x1a8] sm:$0xf]
        %v547 = vld [vmem:[%s362 + $0x1ac] sm:$0xf]
        %v548 = vld [vmem:[%s362 + $0x1b0] sm:$0xf]
        %v549 = vld [vmem:[%s362 + $0x1b4] sm:$0xf]
        %v550 = vld [vmem:[%s362 + $0x1b8] sm:$0xf]
        %v551 = vld [vmem:[%s362 + $0x1bc] sm:$0xf]
        %v552 = vld [vmem:[%s362 + $0x1c0] sm:$0xf]
        %v553 = vld [vmem:[%s362 + $0x1c4] sm:$0xf]
        %v554 = vld [vmem:[%s362 + $0x1c8] sm:$0xf]
        %v555 = vld [vmem:[%s362 + $0x1cc] sm:$0xf]
        %v556 = vld [vmem:[%s362 + $0x1d0] sm:$0xf]
        %v557 = vld [vmem:[%s362 + $0x1d4] sm:$0xf]
        %v558 = vld [vmem:[%s362 + $0x1d8] sm:$0xf]
        %v559 = vld [vmem:[%s362 + $0x1dc] sm:$0xf]
        %v560 = vld [vmem:[%s362 + $0x1e0] sm:$0xf]
        %v561 = vld [vmem:[%s362 + $0x1e4] sm:$0xf]
        %v562 = vld [vmem:[%s362 + $0x1e8] sm:$0xf]
        %v563 = vld [vmem:[%s362 + $0x1ec] sm:$0xf]
        %v564 = vld [vmem:[%s362 + $0x1f0] sm:$0xf]
        %v565 = vld [vmem:[%s362 + $0x1f4] sm:$0xf]
        %v566 = vld [vmem:[%s362 + $0x1f8] sm:$0xf]
        %v567 = vld [vmem:[%s362 + $0x1fc] sm:$0xf]
        %v584 = vunpack.c.l.b16 %v440
        %v585 = vunpack.c.l.b16 %v441
        %v586 = vunpack.c.l.b16 %v442
        %v587 = vunpack.c.l.b16 %v443
        %v588 = vunpack.c.l.b16 %v444
        %v589 = vunpack.c.l.b16 %v445
        %v590 = vunpack.c.l.b16 %v446
        %v591 = vunpack.c.l.b16 %v447
        %v592 = vunpack.c.l.b16 %v448
        %v593 = vunpack.c.l.b16 %v449
        %v594 = vunpack.c.l.b16 %v450
        %v595 = vunpack.c.l.b16 %v451
        %v596 = vunpack.c.l.b16 %v452
        %v597 = vunpack.c.l.b16 %v453
        %v598 = vunpack.c.l.b16 %v454
        %v599 = vunpack.c.l.b16 %v455
        %v600 = vpack.c.b16 %v585, %v584
        %v601 = vpack.c.b16 %v587, %v586
        %v602 = vpack.c.b16 %v589, %v588
        %v603 = vpack.c.b16 %v591, %v590
        %v604 = vpack.c.b16 %v593, %v592
        %v605 = vpack.c.b16 %v595, %v594
        %v606 = vpack.c.b16 %v597, %v596
        %v607 = vpack.c.b16 %v599, %v598
        %616 = vmatpush.bf16.msra.mxu0 %v607
        %617 = vmatpush.bf16.msra.mxu0 %v606
        %618 = vmatpush.bf16.msra.mxu0 %v605
        %619 = vmatpush.bf16.msra.mxu0 %v604
        %620 = vmatpush.bf16.msra.mxu0 %v603
        %621 = vmatpush.bf16.msra.mxu0 %v602
        %622 = vmatpush.bf16.msra.mxu0 %v601
        %623 = vmatpush.bf16.msra.mxu0 %v600
        %624 = vmatmul.bf16.gmra.mxu0 %v432
        %v625 = vpop.f32.mrf.mxu0
        %v626 = vadd.f32 0.0, %v625
        %v627 = vpop.f32.mrf.mxu0
        %628 = vdwg.mxu0
        %v645 = vunpack.c.l.b16 %v456
        %v646 = vunpack.c.l.b16 %v457
        %v647 = vunpack.c.l.b16 %v458
        %v648 = vunpack.c.l.b16 %v459
        %v649 = vunpack.c.l.b16 %v460
        %v650 = vunpack.c.l.b16 %v461
        %v651 = vunpack.c.l.b16 %v462
        %v652 = vunpack.c.l.b16 %v463
        %v653 = vunpack.c.l.b16 %v464
        %v654 = vunpack.c.l.b16 %v465
        %v655 = vunpack.c.l.b16 %v466
        %v656 = vunpack.c.l.b16 %v467
        %v657 = vunpack.c.l.b16 %v468
        %v658 = vunpack.c.l.b16 %v469
        %v659 = vunpack.c.l.b16 %v470
        %v660 = vunpack.c.l.b16 %v471
        %v661 = vpack.c.b16 %v646, %v645
        %v662 = vpack.c.b16 %v648, %v647
        %v663 = vpack.c.b16 %v650, %v649
        %v664 = vpack.c.b16 %v652, %v651
        %v665 = vpack.c.b16 %v654, %v653
        %v666 = vpack.c.b16 %v656, %v655
        %v667 = vpack.c.b16 %v658, %v657
        %v668 = vpack.c.b16 %v660, %v659
        %677 = vmatpush.bf16.msra.mxu0 %v668
        %678 = vmatpush.bf16.msra.mxu0 %v667
        %679 = vmatpush.bf16.msra.mxu0 %v666
        %680 = vmatpush.bf16.msra.mxu0 %v665
        %681 = vmatpush.bf16.msra.mxu0 %v664
        %682 = vmatpush.bf16.msra.mxu0 %v663
        %683 = vmatpush.bf16.msra.mxu0 %v662
        %684 = vmatpush.bf16.msra.mxu0 %v661
        %685 = vmatmul.bf16.gmra.mxu0 %v433
        %v686 = vpop.f32.mrf.mxu0
        %v687 = vadd.f32 0.0, %v686
        %v688 = vpop.f32.mrf.mxu0
        %689 = vdwg.mxu0
        %v706 = vunpack.c.l.b16 %v472
        %v707 = vunpack.c.l.b16 %v473
        %v708 = vunpack.c.l.b16 %v474
        %v709 = vunpack.c.l.b16 %v475
        %v710 = vunpack.c.l.b16 %v476
        %v711 = vunpack.c.l.b16 %v477
        %v712 = vunpack.c.l.b16 %v478
        %v713 = vunpack.c.l.b16 %v479
        %v714 = vunpack.c.l.b16 %v480
        %v715 = vunpack.c.l.b16 %v481
        %v716 = vunpack.c.l.b16 %v482
        %v717 = vunpack.c.l.b16 %v483
        %v718 = vunpack.c.l.b16 %v484
        %v719 = vunpack.c.l.b16 %v485
        %v720 = vunpack.c.l.b16 %v486
        %v721 = vunpack.c.l.b16 %v487
        %v722 = vpack.c.b16 %v707, %v706
        %v723 = vpack.c.b16 %v709, %v708
        %v724 = vpack.c.b16 %v711, %v710
        %v725 = vpack.c.b16 %v713, %v712
        %v726 = vpack.c.b16 %v715, %v714
        %v727 = vpack.c.b16 %v717, %v716
        %v728 = vpack.c.b16 %v719, %v718
        %v729 = vpack.c.b16 %v721, %v720
        %738 = vmatpush.bf16.msra.mxu0 %v729
        %739 = vmatpush.bf16.msra.mxu0 %v728
        %740 = vmatpush.bf16.msra.mxu0 %v727
        %741 = vmatpush.bf16.msra.mxu0 %v726
        %742 = vmatpush.bf16.msra.mxu0 %v725
        %743 = vmatpush.bf16.msra.mxu0 %v724
        %744 = vmatpush.bf16.msra.mxu0 %v723
        %745 = vmatpush.bf16.msra.mxu0 %v722
        %746 = vmatmul.bf16.gmra.mxu0 %v434
        %v747 = vpop.f32.mrf.mxu0
        %v748 = vadd.f32 0.0, %v747
        %v749 = vpop.f32.mrf.mxu0
        %750 = vdwg.mxu0
        %v767 = vunpack.c.l.b16 %v488
        %v768 = vunpack.c.l.b16 %v489
        %v769 = vunpack.c.l.b16 %v490
        %v770 = vunpack.c.l.b16 %v491
        %v771 = vunpack.c.l.b16 %v492
        %v772 = vunpack.c.l.b16 %v493
        %v773 = vunpack.c.l.b16 %v494
        %v774 = vunpack.c.l.b16 %v495
        %v775 = vunpack.c.l.b16 %v496
        %v776 = vunpack.c.l.b16 %v497
        %v777 = vunpack.c.l.b16 %v498
        %v778 = vunpack.c.l.b16 %v499
        %v779 = vunpack.c.l.b16 %v500
        %v780 = vunpack.c.l.b16 %v501
        %v781 = vunpack.c.l.b16 %v502
        %v782 = vunpack.c.l.b16 %v503
        %v783 = vpack.c.b16 %v768, %v767
        %v784 = vpack.c.b16 %v770, %v769
        %v785 = vpack.c.b16 %v772, %v771
        %v786 = vpack.c.b16 %v774, %v773
        %v787 = vpack.c.b16 %v776, %v775
        %v788 = vpack.c.b16 %v778, %v777
        %v789 = vpack.c.b16 %v780, %v779
        %v790 = vpack.c.b16 %v782, %v781
        %799 = vmatpush.bf16.msra.mxu0 %v790
        %800 = vmatpush.bf16.msra.mxu0 %v789
        %801 = vmatpush.bf16.msra.mxu0 %v788
        %802 = vmatpush.bf16.msra.mxu0 %v787
        %803 = vmatpush.bf16.msra.mxu0 %v786
        %804 = vmatpush.bf16.msra.mxu0 %v785
        %805 = vmatpush.bf16.msra.mxu0 %v784
        %806 = vmatpush.bf16.msra.mxu0 %v783
        %807 = vmatmul.bf16.gmra.mxu0 %v435
        %v808 = vpop.f32.mrf.mxu0
        %v809 = vadd.f32 0.0, %v808
        %v810 = vpop.f32.mrf.mxu0
        %811 = vdwg.mxu0
        %v828 = vunpack.c.l.b16 %v504
        %v829 = vunpack.c.l.b16 %v505
        %v830 = vunpack.c.l.b16 %v506
        %v831 = vunpack.c.l.b16 %v507
        %v832 = vunpack.c.l.b16 %v508
        %v833 = vunpack.c.l.b16 %v509
        %v834 = vunpack.c.l.b16 %v510
        %v835 = vunpack.c.l.b16 %v511
        %v836 = vunpack.c.l.b16 %v512
        %v837 = vunpack.c.l.b16 %v513
        %v838 = vunpack.c.l.b16 %v514
        %v839 = vunpack.c.l.b16 %v515
        %v840 = vunpack.c.l.b16 %v516
        %v841 = vunpack.c.l.b16 %v517
        %v842 = vunpack.c.l.b16 %v518
        %v843 = vunpack.c.l.b16 %v519
        %v844 = vpack.c.b16 %v829, %v828
        %v845 = vpack.c.b16 %v831, %v830
        %v846 = vpack.c.b16 %v833, %v832
        %v847 = vpack.c.b16 %v835, %v834
        %v848 = vpack.c.b16 %v837, %v836
        %v849 = vpack.c.b16 %v839, %v838
        %v850 = vpack.c.b16 %v841, %v840
        %v851 = vpack.c.b16 %v843, %v842
        %860 = vmatpush.bf16.msra.mxu0 %v851
        %861 = vmatpush.bf16.msra.mxu0 %v850
        %862 = vmatpush.bf16.msra.mxu0 %v849
        %863 = vmatpush.bf16.msra.mxu0 %v848
        %864 = vmatpush.bf16.msra.mxu0 %v847
        %865 = vmatpush.bf16.msra.mxu0 %v846
        %866 = vmatpush.bf16.msra.mxu0 %v845
        %867 = vmatpush.bf16.msra.mxu0 %v844
        %868 = vmatmul.bf16.gmra.mxu0 %v436
        %v869 = vpop.f32.mrf.mxu0
        %v870 = vadd.f32 0.0, %v869
        %v871 = vpop.f32.mrf.mxu0
        %872 = vdwg.mxu0
        %v889 = vunpack.c.l.b16 %v520
        %v890 = vunpack.c.l.b16 %v521
        %v891 = vunpack.c.l.b16 %v522
        %v892 = vunpack.c.l.b16 %v523
        %v893 = vunpack.c.l.b16 %v524
        %v894 = vunpack.c.l.b16 %v525
        %v895 = vunpack.c.l.b16 %v526
        %v896 = vunpack.c.l.b16 %v527
        %v897 = vunpack.c.l.b16 %v528
        %v898 = vunpack.c.l.b16 %v529
        %v899 = vunpack.c.l.b16 %v530
        %v900 = vunpack.c.l.b16 %v531
        %v901 = vunpack.c.l.b16 %v532
        %v902 = vunpack.c.l.b16 %v533
        %v903 = vunpack.c.l.b16 %v534
        %v904 = vunpack.c.l.b16 %v535
        %v905 = vpack.c.b16 %v890, %v889
        %v906 = vpack.c.b16 %v892, %v891
        %v907 = vpack.c.b16 %v894, %v893
        %v908 = vpack.c.b16 %v896, %v895
        %v909 = vpack.c.b16 %v898, %v897
        %v910 = vpack.c.b16 %v900, %v899
        %v911 = vpack.c.b16 %v902, %v901
        %v912 = vpack.c.b16 %v904, %v903
        %921 = vmatpush.bf16.msra.mxu0 %v912
        %922 = vmatpush.bf16.msra.mxu0 %v911
        %923 = vmatpush.bf16.msra.mxu0 %v910
        %924 = vmatpush.bf16.msra.mxu0 %v909
        %925 = vmatpush.bf16.msra.mxu0 %v908
        %926 = vmatpush.bf16.msra.mxu0 %v907
        %927 = vmatpush.bf16.msra.mxu0 %v906
        %928 = vmatpush.bf16.msra.mxu0 %v905
        %929 = vmatmul.bf16.gmra.mxu0 %v437
        %v930 = vpop.f32.mrf.mxu0
        %v931 = vadd.f32 0.0, %v930
        %v932 = vpop.f32.mrf.mxu0
        %933 = vdwg.mxu0
        %v950 = vunpack.c.l.b16 %v536
        %v951 = vunpack.c.l.b16 %v537
        %v952 = vunpack.c.l.b16 %v538
        %v953 = vunpack.c.l.b16 %v539
        %v954 = vunpack.c.l.b16 %v540
        %v955 = vunpack.c.l.b16 %v541
        %v956 = vunpack.c.l.b16 %v542
        %v957 = vunpack.c.l.b16 %v543
        %v958 = vunpack.c.l.b16 %v544
        %v959 = vunpack.c.l.b16 %v545
        %v960 = vunpack.c.l.b16 %v546
        %v961 = vunpack.c.l.b16 %v547
        %v962 = vunpack.c.l.b16 %v548
        %v963 = vunpack.c.l.b16 %v549
        %v964 = vunpack.c.l.b16 %v550
        %v965 = vunpack.c.l.b16 %v551
        %v966 = vpack.c.b16 %v951, %v950
        %v967 = vpack.c.b16 %v953, %v952
        %v968 = vpack.c.b16 %v955, %v954
        %v969 = vpack.c.b16 %v957, %v956
        %v970 = vpack.c.b16 %v959, %v958
        %v971 = vpack.c.b16 %v961, %v960
        %v972 = vpack.c.b16 %v963, %v962
        %v973 = vpack.c.b16 %v965, %v964
        %982 = vmatpush.bf16.msra.mxu0 %v973
        %983 = vmatpush.bf16.msra.mxu0 %v972
        %984 = vmatpush.bf16.msra.mxu0 %v971
        %985 = vmatpush.bf16.msra.mxu0 %v970
        %986 = vmatpush.bf16.msra.mxu0 %v969
        %987 = vmatpush.bf16.msra.mxu0 %v968
        %988 = vmatpush.bf16.msra.mxu0 %v967
        %989 = vmatpush.bf16.msra.mxu0 %v966
        %990 = vmatmul.bf16.gmra.mxu0 %v438
        %v991 = vpop.f32.mrf.mxu0
        %v992 = vadd.f32 0.0, %v991
        %v993 = vpop.f32.mrf.mxu0
        %994 = vdwg.mxu0
        %v1011 = vunpack.c.l.b16 %v552
        %v1012 = vunpack.c.l.b16 %v553
        %v1013 = vunpack.c.l.b16 %v554
        %v1014 = vunpack.c.l.b16 %v555
        %v1015 = vunpack.c.l.b16 %v556
        %v1016 = vunpack.c.l.b16 %v557
        %v1017 = vunpack.c.l.b16 %v558
        %v1018 = vunpack.c.l.b16 %v559
        %v1019 = vunpack.c.l.b16 %v560
        %v1020 = vunpack.c.l.b16 %v561
        %v1021 = vunpack.c.l.b16 %v562
        %v1022 = vunpack.c.l.b16 %v563
        %v1023 = vunpack.c.l.b16 %v564
        %v1024 = vunpack.c.l.b16 %v565
        %v1025 = vunpack.c.l.b16 %v566
        %v1026 = vunpack.c.l.b16 %v567
        %v1027 = vpack.c.b16 %v1012, %v1011
        %v1028 = vpack.c.b16 %v1014, %v1013
        %v1029 = vpack.c.b16 %v1016, %v1015
        %v1030 = vpack.c.b16 %v1018, %v1017
        %v1031 = vpack.c.b16 %v1020, %v1019
        %v1032 = vpack.c.b16 %v1022, %v1021
        %v1033 = vpack.c.b16 %v1024, %v1023
        %v1034 = vpack.c.b16 %v1026, %v1025
        %1043 = vmatpush.bf16.msra.mxu0 %v1034
        %1044 = vmatpush.bf16.msra.mxu0 %v1033
        %1045 = vmatpush.bf16.msra.mxu0 %v1032
        %1046 = vmatpush.bf16.msra.mxu0 %v1031
        %1047 = vmatpush.bf16.msra.mxu0 %v1030
        %1048 = vmatpush.bf16.msra.mxu0 %v1029
        %1049 = vmatpush.bf16.msra.mxu0 %v1028
        %1050 = vmatpush.bf16.msra.mxu0 %v1027
        %1051 = vmatmul.bf16.gmra.mxu0 %v439
        %v1052 = vpop.f32.mrf.mxu0
        %v1053 = vadd.f32 0.0, %v1052
        %v1054 = vpop.f32.mrf.mxu0
        %1055 = vdwg.mxu0
        %v1056 = vadd.f32 %v424, %v626
        %v1057 = vadd.f32 %v425, %v687
        %v1058 = vadd.f32 %v426, %v748
        %v1059 = vadd.f32 %v427, %v809
        %v1060 = vadd.f32 %v428, %v870
        %v1061 = vadd.f32 %v429, %v931
        %v1062 = vadd.f32 %v430, %v992
        %v1063 = vadd.f32 %v431, %v1053
        %1064 = vst [vmem:[#allocation2] sm:$0x1] %v1056
        %1065 = vst [vmem:[#allocation2 + $0x1] sm:$0x1] %v1057
        %1066 = vst [vmem:[#allocation2 + $0x2] sm:$0x1] %v1058
        %1067 = vst [vmem:[#allocation2 + $0x3] sm:$0x1] %v1059
        %1068 = vst [vmem:[#allocation2 + $0x4] sm:$0x1] %v1060
        %1069 = vst [vmem:[#allocation2 + $0x5] sm:$0x1] %v1061
        %1070 = vst [vmem:[#allocation2 + $0x6] sm:$0x1] %v1062
        %1071 = vst [vmem:[#allocation2 + $0x7] sm:$0x1] %v1063
        %p1072 = scmp.eq.s32.totalorder %s26, 1
        // Predicated region
        $region94: #{tpu_custom_call.1} parent=76 // pred_check
          %p1073 = pneg %p1072
        $region95: #{tpu_custom_call.1} parent=76 // pred_check_branch
          %1075 = sbr.rel (%p1073) target = $region97
        $region96: #{tpu_custom_call.1} parent=76 // pred_region
          %v1076 = vld [vmem:[#allocation2] sm:$0x1]
          %v1077 = vld [vmem:[#allocation2 + $0x1] sm:$0x1]
          %v1078 = vld [vmem:[#allocation2 + $0x2] sm:$0x1]
          %v1079 = vld [vmem:[#allocation2 + $0x3] sm:$0x1]
          %v1080 = vld [vmem:[#allocation2 + $0x4] sm:$0x1]
          %v1081 = vld [vmem:[#allocation2 + $0x5] sm:$0x1]
          %v1082 = vld [vmem:[#allocation2 + $0x6] sm:$0x1]
          %v1083 = vld [vmem:[#allocation2 + $0x7] sm:$0x1]
          %v1084 = vld [vmem:[%s411] sm:$0xff]
          %1086 = vset.pattern.permute.xlu0 0
          %1087 = vperm.xlu0 %1086, %v1084
          %v1088 = vpop.permute.xlu0 %1087
          %v1089 = vperm.slane %v1088, 0
          %v1090 = vperm.slane %v1088, 1
          %v1091 = vperm.slane %v1088, 2
          %v1092 = vperm.slane %v1088, 3
          %v1093 = vperm.slane %v1088, 4
          %v1094 = vperm.slane %v1088, 5
          %v1095 = vperm.slane %v1088, 6
          %v1096 = vperm.slane %v1088, 7
          %v1105 = vmul.f32 %v1076, %v1089
          %v1106 = vmul.f32 %v1077, %v1090
          %v1107 = vmul.f32 %v1078, %v1091
          %v1108 = vmul.f32 %v1079, %v1092
          %v1109 = vmul.f32 %v1080, %v1093
          %v1110 = vmul.f32 %v1081, %v1094
          %v1111 = vmul.f32 %v1082, %v1095
          %v1112 = vmul.f32 %v1083, %v1096
          %v1113 = vld [vmem:[#allocation7] sm:$0xff]
          %v1114 = vld [vmem:[#allocation7 + $0x8] sm:$0xff]
          %v1115 = vld [vmem:[#allocation7 + $0x10] sm:$0xff]
          %v1116 = vld [vmem:[#allocation7 + $0x18] sm:$0xff]
          %v1117 = vld [vmem:[#allocation7 + $0x20] sm:$0xff]
          %v1118 = vld [vmem:[#allocation7 + $0x28] sm:$0xff]
          %v1119 = vld [vmem:[#allocation7 + $0x30] sm:$0xff]
          %v1120 = vld [vmem:[#allocation7 + $0x38] sm:$0xff]
          %v1121 = vld [vmem:[#allocation7 + $0x40] sm:$0xff]
          %v1122 = vld [vmem:[#allocation7 + $0x48] sm:$0xff]
          %v1123 = vld [vmem:[#allocation7 + $0x50] sm:$0xff]
          %v1124 = vld [vmem:[#allocation7 + $0x58] sm:$0xff]
          %v1125 = vld [vmem:[#allocation7 + $0x60] sm:$0xff]
          %v1126 = vld [vmem:[#allocation7 + $0x68] sm:$0xff]
          %v1127 = vld [vmem:[#allocation7 + $0x70] sm:$0xff]
          %v1128 = vld [vmem:[#allocation7 + $0x78] sm:$0xff]
          %v1129 = vld [vmem:[%s4] sm:$0x1]
          %v1131 = vperm.slane %v1129, 0
          %1141 = vst [vmem:[#allocation1] ss:$9 sm:$0xff] %v1105
          %s1142 = scalar_lea.vmem [#allocation1], 1
          %1143 = vst [vmem:[%s1142] ss:$9 sm:$0xff] %v1106
          %s1144 = scalar_lea.vmem [#allocation1], 2
          %1145 = vst [vmem:[%s1144] ss:$9 sm:$0xff] %v1107
          %s1146 = scalar_lea.vmem [#allocation1], 3
          %1147 = vst [vmem:[%s1146] ss:$9 sm:$0xff] %v1108
          %s1148 = scalar_lea.vmem [#allocation1], 4
          %1149 = vst [vmem:[%s1148] ss:$9 sm:$0xff] %v1109
          %s1150 = scalar_lea.vmem [#allocation1], 5
          %1151 = vst [vmem:[%s1150] ss:$9 sm:$0xff] %v1110
          %s1152 = scalar_lea.vmem [#allocation1], 6
          %1153 = vst [vmem:[%s1152] ss:$9 sm:$0xff] %v1111
          %s1154 = scalar_lea.vmem [#allocation1], 7
          %1155 = vst [vmem:[%s1154] ss:$9 sm:$0xff] %v1112
          %v1156 = vld [vmem:[#allocation1] sm:$0xff]
          %1158 = vmatpush.msra.mxu0 %v1128
          %1159 = vmatpush.msra.mxu0 %v1127
          %1160 = vmatpush.msra.mxu0 %v1126
          %1161 = vmatpush.msra.mxu0 %v1125
          %1162 = vmatpush.msra.mxu0 %v1124
          %1163 = vmatpush.msra.mxu0 %v1123
          %1164 = vmatpush.msra.mxu0 %v1122
          %1165 = vmatpush.msra.mxu0 %v1121
          %1166 = vmatpush.msra.mxu0 %v1120
          %1167 = vmatpush.msra.mxu0 %v1119
          %1168 = vmatpush.msra.mxu0 %v1118
          %1169 = vmatpush.msra.mxu0 %v1117
          %1170 = vmatpush.msra.mxu0 %v1116
          %1171 = vmatpush.msra.mxu0 %v1115
          %1172 = vmatpush.msra.mxu0 %v1114
          %1173 = vmatpush.msra.mxu0 %v1113
          %1174 = vmatmul.f32.gmra.mxu0 %v1156
          %v1175 = vpop.f32.mrf.mxu0
          %v1176 = vadd.f32 %v1131, %v1175
          %1177 = vdwg.mxu0
          %1178 = vst [vmem:[#allocation9] sm:$0xff] %v1176
        $region97: #{tpu_custom_call.1} parent=76 // pred_fallthru
          _
        // Predicated region
        $region98: #{tpu_custom_call.1} parent=76 // pred_check
          %p1179 = pneg %p175
        $region99: #{tpu_custom_call.1} parent=76 // pred_check_branch
          %1181 = sbr.rel (%p1179) target = $region101
        $region100: #{tpu_custom_call.1} parent=76 // pred_region
          %1183 = vsyncadd [#allocation5], 0
          %s1184 = smul.addr %s25, 8
          %s1185 = scalar_lea.hbm %s5, %s1184
          %s1187 = sshll.u32 [#allocation9], 4
          %s1188 = int_to_ptr.vmem [resolvable:$true] %s1187
          %s1189 = sshll.u32 %s1185, 4
          %s1190 = int_to_ptr.hbm [resolvable:$true] %s1189
          %1192 = dma.vmem_to_hbm [thread:$0]  %s1188, 128, %s1190, [#allocation5]
        $region101: #{tpu_custom_call.1} parent=76 // pred_fallthru
          _
        // Predicated region
        $region102: #{tpu_custom_call.1} parent=76 // pred_check
          %p1193 = pneg %p175
        $region103: #{tpu_custom_call.1} parent=76 // pred_check_branch
          %1195 = sbr.rel (%p1193) target = $region105
        $region104: #{tpu_custom_call.1} parent=76 // pred_region
          %1197 = dma.done [#allocation5], 128
        $region105: #{tpu_custom_call.1} parent=76 // pred_fallthru
          _
      $region77: #{tpu_custom_call.1} parent=5 // pred_fallthru
        _
      %p1198 = scmp.le.s32.totalorder 2, %s16
      // Predicated region
      $region106: #{tpu_custom_call.1} parent=5 // pred_check
        %p1199 = pneg %p1198
      $region107: #{tpu_custom_call.1} parent=5 // pred_check_branch
        %1201 = sbr.rel (%p1199) target = $region109
      $region108: #{tpu_custom_call.1} parent=5 // pred_region
        %s1202 = ssub.s32 %s16, 2
      $region109: #{tpu_custom_call.1} parent=5 // pred_fallthru
        _
    $region6: #{tpu_custom_call.1} parent=1 // loop_footer
      %s20 = sadd.s32 1, %s16
    $region7: #{tpu_custom_call.1} parent=1 // loop_footer_branch
      %15 = sbr.rel target = $region3
    $region8: #{tpu_custom_call.1} parent=1 // loop_exit
      _
    %1203 = vsyncpa [#allocation4], 1
    %s1204 = scalar_lea.sflag [#allocation4], 1
    %1205 = vsyncpa %s1204, 1
    %1206 = vsyncpa [#allocation8], 1
    %1207 = vsyncpa [#allocation5], 1
    %s1208 = scalar_lea.sflag [#allocation5], 1
    %1209 = vsyncpa %s1208, 1

</llo_original>
